<compile_context>
chip_gen: v7x
topology: tpu7x:2x2x1
jax: 0.10.0
libtpu: 0.0.40
codegen_flags: <defaults>
</compile_context>

<pallas_src>
import functools
import math

import jax
import jax.numpy as jnp
from jax.experimental import pallas as pl
from jax.experimental.pallas import tpu as pltpu


_MAX_TILE_B = 2048            # sublanes per grid step (out block ~2048*33*4B ≈ 270 KiB)
_SMALL_BATCH_THRESHOLD = 128  # below this, skip pallas_call entirely


def _round_up(v: int, m: int) -> int:
    return ((v + m - 1) // m) * m


def _sinusoidal_emb_kernel(x_ref, w_ref, o_ref, *, half_dim):
    # x_ref: (TB, 1) f32           -- batch on sublanes
    # w_ref: (1, half_dim) f32     -- 2*pi already folded in, resident in VMEM
    # o_ref: (TB, 1 + 2*half_dim)  -- PyTorch layout, written in one pass
    x = x_ref[...]                      # (TB, 1)
    w = w_ref[...]                      # (1, half_dim)
    freqs = x * w                       # broadcast outer product (VPU), (TB, half_dim)
    # Direct static slice stores along the lane axis: [x | sin | cos].
    o_ref[:, 0:1] = x
    o_ref[:, 1:1 + half_dim] = jnp.sin(freqs)
    o_ref[:, 1 + half_dim:] = jnp.cos(freqs)


def _reference_jnp(x, weights):
    """Plain-JAX forward, identical math to the PyTorch module."""
    xf = x.astype(jnp.float32)[:, None]
    wf = weights.astype(jnp.float32)[None, :]
    freqs = xf * wf * (2.0 * math.pi)
    return jnp.concatenate([xf, jnp.sin(freqs), jnp.cos(freqs)], axis=-1)


def _choose_tile_b(b: int) -> int:
    """Adaptive sublane tile: small batches get one tight step; larger batches
    get >= 2 steps (v7x megacore) capped at _MAX_TILE_B sublanes."""
    b8 = _round_up(b, 8)
    if b8 <= 256:
        return b8
    tile = _round_up(pl.cdiv(b8, 2), 8)
    return min(tile, _MAX_TILE_B)


def random_or_learned_sinusoidal_pos_emb(x, weights, *, force_pallas=False):
    """x: (b,) float, weights: (half_dim,) float -> (b, 2*half_dim + 1).

    Matches PyTorch: cat([x[:, None], sin(2*pi*x*w), cos(2*pi*x*w)], dim=-1).
    """
    b = x.shape[0]
    half_dim = weights.shape[0]
    out_dim = 2 * half_dim + 1

    if (not force_pallas) and b < _SMALL_BATCH_THRESHOLD:
        # Launch + per-step-overhead dominated regime; plain XLA is cheaper.
        # TODO(synk): in a full model, fuse this into the time-embedding MLP kernel.
        return _reference_jnp(x, weights)

    tile_b = _choose_tile_b(b)
    b_pad = _round_up(_round_up(b, 8), tile_b)
    grid = (b_pad // tile_b,)

    # Batch goes on sublanes (column vector); padded rows are sliced off below.
    x_col = jnp.zeros((b_pad, 1), jnp.float32).at[:b, 0].set(x.astype(jnp.float32))
    # Fold the constant 2*pi into the tiny constant weight vector once.
    w_row = (weights.astype(jnp.float32) * (2.0 * math.pi)).reshape(1, half_dim)

    out = pl.pallas_call(
        functools.partial(_sinusoidal_emb_kernel, half_dim=half_dim),
        out_shape=jax.ShapeDtypeStruct((b_pad, out_dim), jnp.float32),
        grid=grid,
        in_specs=[
            # batch tile of x: walks along sublanes with the grid
            pl.BlockSpec((tile_b, 1), lambda i: (i, 0)),
            # weights: constant block, stays resident in VMEM across steps
            pl.BlockSpec((1, half_dim), lambda i: (0, 0)),
        ],
        # out_dim is the full last dim -> single HBM pass, no external transpose
        out_specs=pl.BlockSpec((tile_b, out_dim), lambda i: (i, 0)),
        compiler_params=pltpu.CompilerParams(
            dimension_semantics=("parallel",),
        ),
        cost_estimate=pl.CostEstimate(
            flops=b_pad * half_dim,
            transcendentals=2 * b_pad * half_dim,
            bytes_accessed=4 * (b_pad + half_dim + b_pad * out_dim),
        ),
    )(x_col, w_row)

    return out[:b]


if __name__ == "__main__":
    # Module config: dim must be even; dim=32 -> half_dim=16 learned/random freqs.
    dim = 32
    half_dim = dim // 2

    key = jax.random.PRNGKey(0)
    kx, kw, kx2 = jax.random.split(key, 3)

    # Parameter init (torch.randn(half_dim) analogue) and deterministic timesteps.
    weights = jax.random.normal(kw, (half_dim,), dtype=jnp.float32)

    # 1) Small batch, forced through the Pallas kernel (single grid step).
    x_small = jax.random.uniform(kx, (8,), dtype=jnp.float32)
    out_small = jax.block_until_ready(
        random_or_learned_sinusoidal_pos_emb(x_small, weights, force_pallas=True)
    )
    ref_small = _reference_jnp(x_small, weights)
    assert out_small.shape == (8, dim + 1)
    assert jnp.allclose(out_small, ref_small, atol=1e-5, rtol=1e-5)

    # 2) Larger batch exercising the multi-step "parallel" grid (2 steps).
    x_big = jax.random.uniform(kx2, (300,), dtype=jnp.float32)
    out_big = jax.block_until_ready(
        random_or_learned_sinusoidal_pos_emb(x_big, weights)
    )
    ref_big = _reference_jnp(x_big, weights)
    assert out_big.shape == (300, dim + 1)
    assert jnp.allclose(out_big, ref_big, atol=1e-5, rtol=1e-5)

    print("KERNEL_OK")
</pallas_src>

<mosaic_0001>
module attributes {stable_mosaic.version = 11 : i64} {
  func.func @_sinusoidal_emb_kernel(%arg0: i32, %arg1: memref<8x1xf32, #tpu.memory_space<vmem>>, %arg2: memref<1x16xf32, #tpu.memory_space<vmem>>, %arg3: memref<8x33xf32, #tpu.memory_space<vmem>>) attributes {dimension_semantics = [#tpu.dimension_semantics<parallel>], iteration_bounds = array<i64: 1>, scalar_prefetch = 0 : i64, scratch_operands = 0 : i64, tpu.core_type = #tpu.core_type<tc>, window_params = [{transform_indices = @transform_0, window_bounds = array<i64: 8, 1>}, {pipeline_mode = #tpu.pipeline_mode<synchronous>, transform_indices = @transform_1, window_bounds = array<i64: 1, 16>}, {transform_indices = @transform_2, window_bounds = array<i64: 8, 33>}]} {
    %c0 = arith.constant 0 : index
    %c0_0 = arith.constant 0 : index
    %0 = vector.load %arg1[%c0, %c0_0] : memref<8x1xf32, #tpu.memory_space<vmem>>, vector<8x1xf32>
    %c0_1 = arith.constant 0 : index
    %c0_2 = arith.constant 0 : index
    %1 = vector.load %arg2[%c0_1, %c0_2] : memref<1x16xf32, #tpu.memory_space<vmem>>, vector<1x16xf32>
    %2 = vector.broadcast %0 : vector<8x1xf32> to vector<8x16xf32>
    %3 = vector.broadcast %1 : vector<1x16xf32> to vector<8x16xf32>
    %4 = arith.mulf %2, %3 : vector<8x16xf32>
    %c0_3 = arith.constant 0 : index
    %c0_4 = arith.constant 0 : index
    %5 = vector.load %arg3[%c0_3, %c0_4] : memref<8x33xf32, #tpu.memory_space<vmem>>, vector<8x1xf32>
    tpu.vector_store %arg3[%c0_3, %c0_4], %0 {strides = array<i32>} : memref<8x33xf32, #tpu.memory_space<vmem>>, vector<8x1xf32>,
    %6 = math.sin %4 : vector<8x16xf32>
    %c0_5 = arith.constant 0 : index
    %c1 = arith.constant 1 : index
    %7 = vector.load %arg3[%c0_5, %c1] : memref<8x33xf32, #tpu.memory_space<vmem>>, vector<8x16xf32>
    tpu.vector_store %arg3[%c0_5, %c1], %6 {strides = array<i32>} : memref<8x33xf32, #tpu.memory_space<vmem>>, vector<8x16xf32>,
    %8 = math.cos %4 : vector<8x16xf32>
    %c0_6 = arith.constant 0 : index
    %c17 = arith.constant 17 : index
    %9 = vector.load %arg3[%c0_6, %c17] : memref<8x33xf32, #tpu.memory_space<vmem>>, vector<8x16xf32>
    tpu.vector_store %arg3[%c0_6, %c17], %8 {strides = array<i32>} : memref<8x33xf32, #tpu.memory_space<vmem>>, vector<8x16xf32>,
    return
  }
  func.func @transform_0(%arg0: i32) -> (i32, i32) {
    %c0_i32 = arith.constant 0 : i32
    %c0_i32_0 = arith.constant 0 : i32
    return %arg0, %c0_i32 : i32, i32
  }
  func.func @transform_1(%arg0: i32) -> (i32, i32) {
    %c0_i32 = arith.constant 0 : i32
    %c0_i32_0 = arith.constant 0 : i32
    %c0_i32_1 = arith.constant 0 : i32
    return %c0_i32, %c0_i32_0 : i32, i32
  }
  func.func @transform_2(%arg0: i32) -> (i32, i32) {
    %c0_i32 = arith.constant 0 : i32
    %c0_i32_0 = arith.constant 0 : i32
    return %arg0, %c0_i32 : i32, i32
  }
}

</mosaic_0001>

<llo_original>
// kernel: tpu_custom_call.1
$region0: #{tpu_custom_call.1}
  #allocation0 [shape = 'u32[]', space=smem, size = 0x4, offset = 0x4, fixed_abs, tag = 'smem constant byte address 0x4 - core index']
  #allocation1 [shape = 'u32[144,128]{1,0:T(1,128)}', space=vmem, size = 0x12000, scoped, tag = 'internal scratch']
  %s0 = inlined_call_operand.vmem [shape: f32[8,1], index: 0, kind: input, shape index: {}]
  %s1 = inlined_call_operand.vmem [shape: f32[1,16], index: 1, kind: input, shape index: {}]
  %s2 = inlined_call_operand.hbm [shape: f32[8,33], index: 2, kind: output, shape index: {}]
  %s3 = sld [smem:[#allocation0]]
  $region18: #{tpu_custom_call.1} parent=0
    _
  %s5 = ssub.s32 1, %s3
  %s6 = scalar_select 0, %s5, %s3
  $region1: #{tpu_custom_call.1} parent=0
    #allocation2 [shape = 'u8[4096]{0}', space=vmem, size = 0x1000, scoped, tag = 'output window, operand 0, single buffered']
    #allocation3 [shape = 's32[1]{0}', space=sflag, size = 0x4, scoped, tag = 'scoped memory for tpu_custom_call.1']
    %7 = vsyncpa [#allocation3], 0
    // Predicated region
    $region2: #{tpu_custom_call.1} parent=1 // pred_check
      _
    $region3: #{tpu_custom_call.1} parent=1 // pred_check_branch
      %9 = sbr.rel (0) target = $region5
    $region4: #{tpu_custom_call.1} parent=1 // pred_region
      _
    $region5: #{tpu_custom_call.1} parent=1 // pred_fallthru
      _
    // Predicated region
    $region6: #{tpu_custom_call.1} parent=1 // pred_check
      _
    $region7: #{tpu_custom_call.1} parent=1 // pred_check_branch
      %11 = sbr.rel (0) target = $region9
    $region8: #{tpu_custom_call.1} parent=1 // pred_region
      _
    $region9: #{tpu_custom_call.1} parent=1 // pred_fallthru
      _
    %v12 = vld [vmem:[%s0] sm:$0xff]
    %v13 = vld [vmem:[%s1] sm:$0x1]
    %15 = vset.pattern.permute.xlu0 0
    %16 = vperm.xlu0 %15, %v12
    %v17 = vpop.permute.xlu0 %16
    %v20 = vlaneseq
    %v21 = vshrl.u32 %v20, 7
    %v22 = vsub.s32 0, %v21
    %v23 = vrot.slane %v13, %v22
    %v25 = vmul.f32 %v17, %v23
    %vm26 = vcmask 7168
    %27 = vst.msk [vmem:[#allocation2] sm:$0xff] %vm26, %v12
    %v28 = vand.u32 2147483647, %v25
    %vm29 = vcmp.le.f32.partialorder %v28, 0.7853982
    %vm30 = vcmp.lt.s32.totalorder %v25, 0
    %v31 = vand.u32 %v25, 2139095040
    %v32 = vshrl.u32 %v31, 23
    %v33 = vsub.s32 %v32, 127
    %v34 = vand.u32 2147483647, %v25
    %v35 = vand.u32 %v34, 8388607
    %v36 = vor.u32 %v35, 8388608
    %v37 = vsub.s32 0, %v36
    %v38 = vadd.s32 %v33, 1
    %vm39 = vcmp.gt.s32.totalorder %v38, 0
    %v40 = vsel %vm39, %v38, 0
    %v41 = vshrl.u32 %v40, 5
    %v42 = vand.u32 %v40, 31
    %v43 = vsub.s32 32, %v42
    %v44 = vshrl.u32 683565275, %v43
    %v45 = vshll.u32 683565275, %v42
    %v46 = vshrl.u32 2475754826, %v43
    %v47 = vor.u32 %v45, %v46
    %v48 = vshll.u32 2475754826, %v42
    %v49 = vshrl.u32 2131351028, %v43
    %v50 = vor.u32 %v48, %v49
    %v51 = vshll.u32 2131351028, %v42
    %v52 = vshrl.u32 2102212464, %v43
    %v53 = vor.u32 %v51, %v52
    %v54 = vshll.u32 2102212464, %v42
    %v55 = vshrl.u32 920167782, %v43
    %v56 = vor.u32 %v54, %v55
    %v57 = vshll.u32 920167782, %v42
    %v58 = vshrl.u32 1326507024, %v43
    %v59 = vor.u32 %v57, %v58
    %vm60 = vcmp.lt.s32.totalorder %v41, 1
    %vm61 = vcmp.lt.s32.totalorder %v41, 2
    %vm62 = vcmp.lt.s32.totalorder %v41, 3
    %vm63 = vcmp.lt.s32.totalorder %v41, 4
    %v64 = vsel %vm60, %v44, %v47
    %v65 = vsel %vm63, %v53, 2102212464
    %v66 = vsel %vm62, %v50, %v65
    %v67 = vsel %vm61, %v64, %v66
    %v68 = vsel %vm60, %v47, %v50
    %v69 = vsel %vm63, %v56, 920167782
    %v70 = vsel %vm62, %v53, %v69
    %v71 = vsel %vm61, %v68, %v70
    %v72 = vsel %vm60, %v50, %v53
    %v73 = vsel %vm63, %v59, 1326507024
    %v74 = vsel %vm62, %v56, %v73
    %v75 = vsel %vm61, %v72, %v74
    %v76 = vshll.u32 %v36, 8
    %v77 = vmul.u32.u64.compose %v76, %v75
    %v78 = vextract.low.u32 %v77
    %v79 = vextract.high.u32 %v77
    %v80 = vmul.u32.u64.compose %v76, %v71
    %v81 = vextract.low.u32 %v80
    %v82 = vextract.high.u32 %v80
    %v83 = vmul.u32 %v76, %v67
    %v84 = vadd.s32 %v79, %v81
    %vm85 = vc.u32 %v79, %v81
    %v86 = vadd.s32 %v82, 1
    %v87 = vsel %vm85, %v86, %v82
    %v88 = vadd.s32 %v83, %v87
    %v89 = vadd.s32 %v88, 536870912
    %v90 = vshrl.u32 %v89, 30
    %v91 = vshll.u32 %v90, 30
    %v92 = vsub.s32 %v88, %v91
    %vm93 = vcmp.lt.s32.totalorder %v92, 0
    %v94 = vsub.s32 0, %v92
    %v95 = vsel %vm93, %v94, %v92
    %v96 = vclz %v95
    %v97 = vsub.s32 %v96, 2
    %vm98 = vcmp.gt.s32.totalorder 0, %v97
    %v99 = vsel %vm98, 0, %v97
    %v100 = vsub.s32 32, %v99
    %v101 = vshll.u32 %v92, %v99
    %v102 = vshrl.u32 %v84, %v100
    %v103 = vor.u32 %v101, %v102
    %v104 = vsub.s32 4294967266, %v99
    %v105 = vadd.s32 %v104, 127
    %v106 = vshll.u32 %v105, 23
    %v107 = vor.u32 4788187, %v106
    %v108 = vand.u32 2147483647, %v107
    %v110 = vcvt.s32.f32 %v103
    %v111 = vmul.f32 %v110, %v108
    %v112 = vxor.u32 %v111, 2147483648
    %v113 = vsel %vm30, %v112, %v111
    %v114 = vsub.s32 4, %v90
    %v115 = vsel %vm30, %v114, %v90
    %v116 = vsel %vm29, %v25, %v113
    %v117 = vsel %vm29, 0, %v115
    %v118 = vcosq.f32.pop %v116
    %v119 = vsinq.f32.pop %v116
    %vm120 = vweird.f32 %v25
    %v121 = vadd.s32 %v117, 3
    %v122 = vand.u32 %v121, 3
    %vm123 = vcmp.lt.s32.totalorder %v122, 2
    %vm124 = vcmp.eq.s32.totalorder %v122, 0
    %v125 = vxor.u32 %v119, 2147483648
    %v126 = vsel %vm124, %v118, %v125
    %vm127 = vcmp.eq.s32.totalorder %v122, 2
    %v128 = vxor.u32 %v118, 2147483648
    %v129 = vsel %vm127, %v128, %v119
    %v130 = vsel %vm123, %v126, %v129
    %v131 = vsel %vm120, nan, %v130
    %133 = vrot.lane.b32.xlu0 %v131, 1
    %v134 = vpop.permute.xlu0 %133
    %vm136 = vcmask 138248
    %137 = vst.msk [vmem:[#allocation2] sm:$0xff] %vm136, %v134
    %v138 = vand.u32 2147483647, %v25
    %vm139 = vcmp.le.f32.partialorder %v138, 0.7853982
    %vm140 = vcmp.lt.s32.totalorder %v25, 0
    %v141 = vand.u32 %v25, 2139095040
    %v142 = vshrl.u32 %v141, 23
    %v143 = vsub.s32 %v142, 127
    %v144 = vand.u32 2147483647, %v25
    %v145 = vand.u32 %v144, 8388607
    %v146 = vor.u32 %v145, 8388608
    %v147 = vsub.s32 0, %v146
    %v148 = vadd.s32 %v143, 1
    %vm149 = vcmp.gt.s32.totalorder %v148, 0
    %v150 = vsel %vm149, %v148, 0
    %v151 = vshrl.u32 %v150, 5
    %v152 = vand.u32 %v150, 31
    %v153 = vsub.s32 32, %v152
    %v154 = vshrl.u32 683565275, %v153
    %v155 = vshll.u32 683565275, %v152
    %v156 = vshrl.u32 2475754826, %v153
    %v157 = vor.u32 %v155, %v156
    %v158 = vshll.u32 2475754826, %v152
    %v159 = vshrl.u32 2131351028, %v153
    %v160 = vor.u32 %v158, %v159
    %v161 = vshll.u32 2131351028, %v152
    %v162 = vshrl.u32 2102212464, %v153
    %v163 = vor.u32 %v161, %v162
    %v164 = vshll.u32 2102212464, %v152
    %v165 = vshrl.u32 920167782, %v153
    %v166 = vor.u32 %v164, %v165
    %v167 = vshll.u32 920167782, %v152
    %v168 = vshrl.u32 1326507024, %v153
    %v169 = vor.u32 %v167, %v168
    %vm170 = vcmp.lt.s32.totalorder %v151, 1
    %vm171 = vcmp.lt.s32.totalorder %v151, 2
    %vm172 = vcmp.lt.s32.totalorder %v151, 3
    %vm173 = vcmp.lt.s32.totalorder %v151, 4
    %v174 = vsel %vm170, %v154, %v157
    %v175 = vsel %vm173, %v163, 2102212464
    %v176 = vsel %vm172, %v160, %v175
    %v177 = vsel %vm171, %v174, %v176
    %v178 = vsel %vm170, %v157, %v160
    %v179 = vsel %vm173, %v166, 920167782
    %v180 = vsel %vm172, %v163, %v179
    %v181 = vsel %vm171, %v178, %v180
    %v182 = vsel %vm170, %v160, %v163
    %v183 = vsel %vm173, %v169, 1326507024
    %v184 = vsel %vm172, %v166, %v183
    %v185 = vsel %vm171, %v182, %v184
    %v186 = vshll.u32 %v146, 8
    %v187 = vmul.u32.u64.compose %v186, %v185
    %v188 = vextract.low.u32 %v187
    %v189 = vextract.high.u32 %v187
    %v190 = vmul.u32.u64.compose %v186, %v181
    %v191 = vextract.low.u32 %v190
    %v192 = vextract.high.u32 %v190
    %v193 = vmul.u32 %v186, %v177
    %v194 = vadd.s32 %v189, %v191
    %vm195 = vc.u32 %v189, %v191
    %v196 = vadd.s32 %v192, 1
    %v197 = vsel %vm195, %v196, %v192
    %v198 = vadd.s32 %v193, %v197
    %v199 = vadd.s32 %v198, 536870912
    %v200 = vshrl.u32 %v199, 30
    %v201 = vshll.u32 %v200, 30
    %v202 = vsub.s32 %v198, %v201
    %vm203 = vcmp.lt.s32.totalorder %v202, 0
    %v204 = vsub.s32 0, %v202
    %v205 = vsel %vm203, %v204, %v202
    %v206 = vclz %v205
    %v207 = vsub.s32 %v206, 2
    %vm208 = vcmp.gt.s32.totalorder 0, %v207
    %v209 = vsel %vm208, 0, %v207
    %v210 = vsub.s32 32, %v209
    %v211 = vshll.u32 %v202, %v209
    %v212 = vshrl.u32 %v194, %v210
    %v213 = vor.u32 %v211, %v212
    %v214 = vsub.s32 4294967266, %v209
    %v215 = vadd.s32 %v214, 127
    %v216 = vshll.u32 %v215, 23
    %v217 = vor.u32 4788187, %v216
    %v218 = vand.u32 2147483647, %v217
    %v220 = vcvt.s32.f32 %v213
    %v221 = vmul.f32 %v220, %v218
    %v222 = vxor.u32 %v221, 2147483648
    %v223 = vsel %vm140, %v222, %v221
    %v224 = vsub.s32 4, %v200
    %v225 = vsel %vm140, %v224, %v200
    %v226 = vsel %vm139, %v25, %v223
    %v227 = vsel %vm139, 0, %v225
    %v228 = vcosq.f32.pop %v226
    %v229 = vsinq.f32.pop %v226
    %vm230 = vweird.f32 %v25
    %v231 = vand.u32 %v227, 3
    %vm232 = vcmp.lt.s32.totalorder %v231, 2
    %vm233 = vcmp.eq.s32.totalorder %v231, 0
    %v234 = vxor.u32 %v229, 2147483648
    %v235 = vsel %vm233, %v228, %v234
    %vm236 = vcmp.eq.s32.totalorder %v231, 2
    %v237 = vxor.u32 %v228, 2147483648
    %v238 = vsel %vm236, %v237, %v229
    %v239 = vsel %vm232, %v235, %v238
    %v240 = vsel %vm230, nan, %v239
    %242 = vrot.lane.b32.xlu0 %v240, 17
    %v243 = vpop.permute.xlu0 %242
    %vm245 = vcmask 269448
    %246 = vst.msk [vmem:[#allocation2] sm:$0xff] %vm245, %v243
    // Predicated region
    $region10: #{tpu_custom_call.1} parent=1 // pred_check
      _
    $region11: #{tpu_custom_call.1} parent=1 // pred_check_branch
      %248 = sbr.rel (0) target = $region13
    $region12: #{tpu_custom_call.1} parent=1 // pred_region
      %s250 = ssub.s32 128, 128
      %251 = vsyncadd [#allocation3], %s250
      %s253 = sshll.u32 [#allocation2], 4
      %s254 = int_to_ptr.vmem [resolvable:$true] %s253
      %256 = dma.vmem_to_hbm [thread:$0]  %s254, 128, %s2, [#allocation3]
    $region13: #{tpu_custom_call.1} parent=1 // pred_fallthru
      _
    // Predicated region
    $region14: #{tpu_custom_call.1} parent=1 // pred_check
      _
    $region15: #{tpu_custom_call.1} parent=1 // pred_check_branch
      %258 = sbr.rel (0) target = $region17
    $region16: #{tpu_custom_call.1} parent=1 // pred_region
      %259 = dma.done [#allocation3], 128
    $region17: #{tpu_custom_call.1} parent=1 // pred_fallthru
      _
    %260 = vsyncpa [#allocation3], 1

</llo_original>
